<compile_context>
chip_gen: v7x
topology: tpu7x:2x2x1
jax: 0.10.0
libtpu: 0.0.40
codegen_flags: <defaults>
</compile_context>

<pallas_src>
import functools
import math

import jax
import jax.numpy as jnp
from jax.experimental import pallas as pl
from jax.experimental.pallas import tpu as pltpu


def _coordatt_kernel(h, w,
                     x_ref, pool_ref, scale_ref, eh_ref, ew_ref,
                     w1_ref, b1_ref, wh_ref, bh_ref, ww_ref, bw_ref,
                     out_ref):
    """One grid step = an (nb*C, H*W) slab, lane-dense on H*W; all ops 2-D."""
    xs = x_ref[...]                       # (R, HW), native I/O dtype (no cast)
    cdt = xs.dtype

    # Adaptive average pools (over W and over H) as one lane-contraction matmul
    # against a one-hot matrix (exact in bf16); mean scales applied in f32 on
    # the small pooled result.
    pooled = jnp.dot(xs, pool_ref[...],
                     preferred_element_type=jnp.float32)          # (R, H+W) f32
    pooled = pooled * scale_ref[...]                              # 1/W | 1/H

    # conv1 (1x1, BN folded) + h_swish; batched over the block via a
    # block-diagonal weight (single 2-D matmul, bias added once per step).
    y = jnp.dot(w1_ref[...], pooled,
                preferred_element_type=jnp.float32) + b1_ref[...]  # (nb*MIP, H+W)
    y = y * (jnp.clip(y + 3.0, 0.0, 6.0) * (1.0 / 6.0))            # h_swish

    yh = y[:, :h]                                                  # (nb*MIP, H)
    yw = y[:, h:]                                                  # (nb*MIP, W)

    # conv_h / conv_w (1x1) + sigmoid -> per-(batch, channel) gate vectors.
    a_h = jax.nn.sigmoid(
        jnp.dot(wh_ref[...], yh, preferred_element_type=jnp.float32)
        + bh_ref[...])                                             # (nb*C, H)
    a_w = jax.nn.sigmoid(
        jnp.dot(ww_ref[...], yw, preferred_element_type=jnp.float32)
        + bw_ref[...])                                             # (nb*C, W)

    # Expand both gates straight into the flattened (R, HW) lane layout on the
    # MXU.  The expansion matrices are one-hot selections, so producing the
    # result directly in the I/O dtype is exact per element; on the bf16 path
    # this keeps the temporaries packed and the final multiply a bf16 VPU op.
    gate = (jnp.dot(a_h.astype(cdt), eh_ref[...], preferred_element_type=cdt) *
            jnp.dot(a_w.astype(cdt), ew_ref[...], preferred_element_type=cdt))

    out_ref[...] = (xs * gate).astype(out_ref.dtype)               # dense vst


def _vmem_plan(const_bytes):
    """Generation-aware working-set budget and explicit scoped-VMEM limit."""
    cap = 64 << 20                       # conservative fallback (v7x per-TC VMEM)
    try:
        info = pltpu.get_tpu_info()
        cap = int(getattr(info, "vmem_capacity_bytes", cap)) or cap
    except Exception:
        pass
    # Constants get two pipeline buffers even though their block index never
    # changes (so they are only DMA'd once); subtract them from the budget.
    budget = max(4 << 20, min(cap // 3, 40 << 20) - 2 * const_bytes)
    limit = int(min(cap - (8 << 20),
                    max(budget + 2 * const_bytes + (8 << 20), 32 << 20)))
    return budget, limit


def _pick_batch_block(n, c, hw, itemsize, mip, budget_bytes):
    """Batch elements per grid step.  The block's leading dim is nb*C rows of
    the flattened (N*C, H*W) slab, so nb*C must be a multiple of 8 (sublane
    tiling) unless the block covers the whole batch.  Keep >= 4 grid steps
    (2 per v7x TensorCore) when the batch allows so the pipeline overlaps."""
    m = 8 // math.gcd(c, 8)                   # smallest nb with (nb*c) % 8 == 0
    if n <= m:
        return n, n                           # single step, block == full array

    def vmem_cost(nb):
        slab = nb * c * hw
        io = 4 * slab * itemsize              # x + out blocks, double-buffered
        tmp = 3 * slab * itemsize             # gate_h / gate_w / gate temporaries
        bd = 6 * (nb * mip) * (nb * c) * 4    # block-diag conv weights (f32, x2)
        return io + tmp + bd

    nb = m
    while nb + m <= n and vmem_cost(nb + m) <= budget_bytes:
        nb += m
    while nb > m and -(-n // nb) < 4:         # >= 2 steps per v7x TensorCore
        nb -= m
    n_pad = -(-n // nb) * nb                  # ragged batch: pad, don't shrink
    return nb, n_pad


def coord_att(x, params, *, batch_block=None):
    """x: (N, C, H, W), float32 or bfloat16.  params: dict (see init_params)."""
    n, c, h, w = x.shape
    hw = h * w

    w1 = params["w1"].astype(jnp.float32)            # (MIP, C)
    mip = w1.shape[0]
    wh = params["wh"].astype(jnp.float32)            # (OUP, MIP)
    ww = params["ww"].astype(jnp.float32)
    oup = wh.shape[0]
    assert oup == c, "CoordAtt output gating requires oup == inp"

    # Fold BatchNorm (eval mode, running stats) into the conv1 weight/bias.
    eps = 1e-5
    bn_scale = params["bn_gamma"] / jnp.sqrt(params["bn_var"] + eps)
    bn_bias = params["bn_beta"] - params["bn_mean"] * bn_scale
    w1f = bn_scale[:, None] * w1                      # (MIP, C)
    b1f = bn_scale * params["b1"] + bn_bias           # (MIP,)

    # One-hot pooling / lane-expansion constants (exact in bf16); the 1/W and
    # 1/H mean scales live in a separate f32 row applied after the matmul.
    cdt = x.dtype
    idx = jnp.arange(hw)
    hi = idx // w
    wi = idx % w
    pool_onehot = jnp.concatenate(
        [(hi[:, None] == jnp.arange(h)[None, :]),
         (wi[:, None] == jnp.arange(w)[None, :])], axis=1).astype(cdt)   # (HW, H+W)
    pool_scale = jnp.concatenate(
        [jnp.full((h,), 1.0 / w, jnp.float32),
         jnp.full((w,), 1.0 / h, jnp.float32)]).reshape(1, h + w)        # (1, H+W)
    eh = (jnp.arange(h)[:, None] == hi[None, :]).astype(cdt)             # (H, HW)
    ew = (jnp.arange(w)[:, None] == wi[None, :]).astype(cdt)             # (W, HW)

    const_bytes = 2 * hw * (h + w) * cdt.itemsize + (h + w) * 4
    budget, vmem_limit = _vmem_plan(const_bytes)

    if batch_block is None:
        nb, n_pad = _pick_batch_block(n, c, hw, cdt.itemsize, mip, budget)
    else:
        nb = int(batch_block)
        n_pad = -(-n // nb) * nb
        assert (nb * c) % 8 == 0 or nb == n_pad, \
            "batch_block*C must be a multiple of 8 (or cover the whole batch)"

    # Batched 1x1 convs as single 2-D matmuls via block-diagonal weights
    # (keeps the kernel body free of per-batch loops and 3-D reshapes).
    eye = jnp.eye(nb, dtype=jnp.float32)
    w1_bd = jnp.kron(eye, w1f)                                    # (nb*MIP, nb*C)
    wh_bd = jnp.kron(eye, wh)                                     # (nb*C,  nb*MIP)
    ww_bd = jnp.kron(eye, ww)
    b1_bd = jnp.tile(b1f, nb).reshape(nb * mip, 1)
    bh_bd = jnp.tile(params["bh"].astype(jnp.float32), nb).reshape(nb * c, 1)
    bw_bd = jnp.tile(params["bw"].astype(jnp.float32), nb).reshape(nb * c, 1)

    if n_pad != n:        # ragged batch: pad with zeros, slice off afterwards
        x = jnp.pad(x, ((0, n_pad - n), (0, 0), (0, 0), (0, 0)))
    x_flat = x.reshape(n_pad * c, hw)     # contiguous -> free reshape in HBM

    consts = (pool_onehot, pool_scale, eh, ew,
              w1_bd, b1_bd, wh_bd, bh_bd, ww_bd, bw_bd)
    full2d = lambda a: pl.BlockSpec(a.shape, lambda i: (0, 0))
    rows = nb * c

    out_flat = pl.pallas_call(
        functools.partial(_coordatt_kernel, h, w),
        out_shape=jax.ShapeDtypeStruct((n_pad * c, hw), x.dtype),
        grid_spec=pltpu.PrefetchScalarGridSpec(
            num_scalar_prefetch=0,
            grid=(n_pad // nb,),
            in_specs=[pl.BlockSpec((rows, hw), lambda i: (i, 0))]
                     + [full2d(a) for a in consts],
            out_specs=pl.BlockSpec((rows, hw), lambda i: (i, 0)),
        ),
        compiler_params=pltpu.CompilerParams(
            dimension_semantics=("parallel",),
            vmem_limit_bytes=vmem_limit),
    )(x_flat, *consts)
    return out_flat.reshape(n_pad, c, h, w)[:n]


def init_params(key, inp, oup, reduction=32):
    mip = max(8, inp // reduction)
    ks = jax.random.split(key, 6)
    return {
        "w1": 0.1 * jax.random.normal(ks[0], (mip, inp), jnp.float32),
        "b1": 0.1 * jax.random.normal(ks[1], (mip,), jnp.float32),
        "bn_gamma": jnp.ones((mip,), jnp.float32),
        "bn_beta": jnp.zeros((mip,), jnp.float32),
        "bn_mean": jnp.zeros((mip,), jnp.float32),
        "bn_var": jnp.ones((mip,), jnp.float32),
        "wh": 0.1 * jax.random.normal(ks[2], (oup, mip), jnp.float32),
        "bh": 0.1 * jax.random.normal(ks[3], (oup,), jnp.float32),
        "ww": 0.1 * jax.random.normal(ks[4], (oup, mip), jnp.float32),
        "bw": 0.1 * jax.random.normal(ks[5], (oup,), jnp.float32),
    }


def coord_att_reference(x, params):
    """Plain-JAX reference mirroring the PyTorch forward (BN in eval mode)."""
    n, c, h, w = x.shape
    eps = 1e-5
    bn_scale = params["bn_gamma"] / jnp.sqrt(params["bn_var"] + eps)
    bn_bias = params["bn_beta"] - params["bn_mean"] * bn_scale

    xf = x.astype(jnp.float32)
    x_h = jnp.mean(xf, axis=3)                          # (N, C, H)
    x_w = jnp.mean(xf, axis=2)                          # (N, C, W)
    y = jnp.concatenate([x_h, x_w], axis=2)             # (N, C, H+W)
    y = jnp.einsum("mc,ncs->nms", params["w1"], y) + params["b1"][None, :, None]
    y = y * bn_scale[None, :, None] + bn_bias[None, :, None]
    y = y * (jnp.clip(y + 3.0, 0.0, 6.0) / 6.0)
    yh, yw = y[:, :, :h], y[:, :, h:]
    a_h = jax.nn.sigmoid(
        jnp.einsum("om,nms->nos", params["wh"], yh) + params["bh"][None, :, None])
    a_w = jax.nn.sigmoid(
        jnp.einsum("om,nms->nos", params["ww"], yw) + params["bw"][None, :, None])
    return xf * a_h[:, :, :, None] * a_w[:, :, None, :]


if __name__ == "__main__":
    key = jax.random.PRNGKey(0)
    kx, kp = jax.random.split(key)

    N, C, H, W = 2, 4, 16, 16          # inp = oup = 4, reduction=32 -> mip = 8
    x = jax.random.normal(kx, (N, C, H, W), jnp.float32)
    params = init_params(kp, inp=C, oup=C, reduction=32)

    # f32 path (kept f32 end-to-end -> exact vs reference).
    out = jax.block_until_ready(coord_att(x, params))
    ref = jax.block_until_ready(coord_att_reference(x, params))
    assert out.shape == (N, C, H, W)
    assert jnp.allclose(out, ref, atol=1e-4, rtol=1e-4), "f32 mismatch vs reference"

    # bf16 I/O path: heavy matmuls + gate multiply stay packed bf16, pooled /
    # conv math in f32 -> halves HBM traffic and VMEM footprint.
    x_bf16 = x.astype(jnp.bfloat16)
    out_bf16 = jax.block_until_ready(coord_att(x_bf16, params))
    ref_bf16 = coord_att_reference(x_bf16.astype(jnp.float32), params)
    assert out_bf16.dtype == jnp.bfloat16
    assert jnp.allclose(out_bf16.astype(jnp.float32), ref_bf16,
                        atol=5e-2, rtol=5e-2), "bf16 mismatch vs reference"

    print("KERNEL_OK")
</pallas_src>

<mosaic_0001>
module attributes {stable_mosaic.version = 11 : i64} {
  func.func @_coordatt_kernel(%arg0: i32, %arg1: memref<8x256xf32, #tpu.memory_space<vmem>>, %arg2: memref<256x32xf32, #tpu.memory_space<vmem>>, %arg3: memref<1x32xf32, #tpu.memory_space<vmem>>, %arg4: memref<16x256xf32, #tpu.memory_space<vmem>>, %arg5: memref<16x256xf32, #tpu.memory_space<vmem>>, %arg6: memref<16x8xf32, #tpu.memory_space<vmem>>, %arg7: memref<16x1xf32, #tpu.memory_space<vmem>>, %arg8: memref<8x16xf32, #tpu.memory_space<vmem>>, %arg9: memref<8x1xf32, #tpu.memory_space<vmem>>, %arg10: memref<8x16xf32, #tpu.memory_space<vmem>>, %arg11: memref<8x1xf32, #tpu.memory_space<vmem>>, %arg12: memref<8x256xf32, #tpu.memory_space<vmem>>) attributes {dimension_semantics = [#tpu.dimension_semantics<parallel>], iteration_bounds = array<i64: 1>, scalar_prefetch = 0 : i64, scratch_operands = 0 : i64, tpu.core_type = #tpu.core_type<tc>, window_params = [{transform_indices = @transform_0, window_bounds = array<i64: 8, 256>}, {pipeline_mode = #tpu.pipeline_mode<synchronous>, transform_indices = @transform_1, window_bounds = array<i64: 256, 32>}, {pipeline_mode = #tpu.pipeline_mode<synchronous>, transform_indices = @transform_2, window_bounds = array<i64: 1, 32>}, {pipeline_mode = #tpu.pipeline_mode<synchronous>, transform_indices = @transform_3, window_bounds = array<i64: 16, 256>}, {pipeline_mode = #tpu.pipeline_mode<synchronous>, transform_indices = @transform_4, window_bounds = array<i64: 16, 256>}, {pipeline_mode = #tpu.pipeline_mode<synchronous>, transform_indices = @transform_5, window_bounds = array<i64: 16, 8>}, {pipeline_mode = #tpu.pipeline_mode<synchronous>, transform_indices = @transform_6, window_bounds = array<i64: 16, 1>}, {pipeline_mode = #tpu.pipeline_mode<synchronous>, transform_indices = @transform_7, window_bounds = array<i64: 8, 16>}, {pipeline_mode = #tpu.pipeline_mode<synchronous>, transform_indices = @transform_8, window_bounds = array<i64: 8, 1>}, {pipeline_mode = #tpu.pipeline_mode<synchronous>, transform_indices = @transform_9, window_bounds = array<i64: 8, 16>}, {pipeline_mode = #tpu.pipeline_mode<synchronous>, transform_indices = @transform_10, window_bounds = array<i64: 8, 1>}, {transform_indices = @transform_11, window_bounds = array<i64: 8, 256>}]} {
    %c0 = arith.constant 0 : index
    %c0_0 = arith.constant 0 : index
    %0 = vector.load %arg1[%c0, %c0_0] : memref<8x256xf32, #tpu.memory_space<vmem>>, vector<8x256xf32>
    %c0_1 = arith.constant 0 : index
    %c0_2 = arith.constant 0 : index
    %1 = vector.load %arg2[%c0_1, %c0_2] : memref<256x32xf32, #tpu.memory_space<vmem>>, vector<256x32xf32>
    %cst = arith.constant dense<0.000000e+00> : vector<8x32xf32>
    %2 = tpu.matmul %0, %1, %cst {dimension_numbers = #tpu.dot_dimension_numbers<[1], [0], [0], [1], [0, 0, 1, 1], [], []>} : vector<8x256xf32>, vector<256x32xf32>, vector<8x32xf32> -> vector<8x32xf32>
    %c0_3 = arith.constant 0 : index
    %c0_4 = arith.constant 0 : index
    %3 = vector.load %arg3[%c0_3, %c0_4] : memref<1x32xf32, #tpu.memory_space<vmem>>, vector<1x32xf32>
    %4 = vector.broadcast %3 : vector<1x32xf32> to vector<8x32xf32>
    %5 = arith.mulf %2, %4 : vector<8x32xf32>
    %c0_5 = arith.constant 0 : index
    %c0_6 = arith.constant 0 : index
    %6 = vector.load %arg6[%c0_5, %c0_6] : memref<16x8xf32, #tpu.memory_space<vmem>>, vector<16x8xf32>
    %cst_7 = arith.constant dense<0.000000e+00> : vector<16x32xf32>
    %7 = tpu.matmul %6, %5, %cst_7 {dimension_numbers = #tpu.dot_dimension_numbers<[1], [0], [0], [1], [0, 0, 1, 1], [], []>} : vector<16x8xf32>, vector<8x32xf32>, vector<16x32xf32> -> vector<16x32xf32>
    %c0_8 = arith.constant 0 : index
    %c0_9 = arith.constant 0 : index
    %8 = vector.load %arg7[%c0_8, %c0_9] : memref<16x1xf32, #tpu.memory_space<vmem>>, vector<16x1xf32>
    %9 = vector.broadcast %8 : vector<16x1xf32> to vector<16x32xf32>
    %10 = arith.addf %7, %9 : vector<16x32xf32>
    %cst_10 = arith.constant 3.000000e+00 : f32
    %11 = vector.broadcast %cst_10 : f32 to vector<16x32xf32>
    %12 = arith.addf %10, %11 : vector<16x32xf32>
    %cst_11 = arith.constant 0.000000e+00 : f32
    %cst_12 = arith.constant 6.000000e+00 : f32
    %13 = vector.broadcast %cst_11 : f32 to vector<16x32xf32>
    %14 = arith.maximumf %13, %12 : vector<16x32xf32>
    %15 = vector.broadcast %cst_12 : f32 to vector<16x32xf32>
    %16 = arith.minimumf %15, %14 : vector<16x32xf32>
    %cst_13 = arith.constant 0.166666672 : f32
    %17 = vector.broadcast %cst_13 : f32 to vector<16x32xf32>
    %18 = arith.mulf %16, %17 : vector<16x32xf32>
    %19 = arith.mulf %10, %18 : vector<16x32xf32>
    %20 = vector.extract_strided_slice %19 {offsets = [0, 0], sizes = [16, 16], strides = [1, 1]} : vector<16x32xf32> to vector<16x16xf32>
    %21 = vector.extract_strided_slice %19 {offsets = [0, 16], sizes = [16, 16], strides = [1, 1]} : vector<16x32xf32> to vector<16x16xf32>
    %c0_14 = arith.constant 0 : index
    %c0_15 = arith.constant 0 : index
    %22 = vector.load %arg8[%c0_14, %c0_15] : memref<8x16xf32, #tpu.memory_space<vmem>>, vector<8x16xf32>
    %cst_16 = arith.constant dense<0.000000e+00> : vector<8x16xf32>
    %23 = tpu.matmul %22, %20, %cst_16 {dimension_numbers = #tpu.dot_dimension_numbers<[1], [0], [0], [1], [0, 0, 1, 1], [], []>} : vector<8x16xf32>, vector<16x16xf32>, vector<8x16xf32> -> vector<8x16xf32>
    %c0_17 = arith.constant 0 : index
    %c0_18 = arith.constant 0 : index
    %24 = vector.load %arg9[%c0_17, %c0_18] : memref<8x1xf32, #tpu.memory_space<vmem>>, vector<8x1xf32>
    %25 = vector.broadcast %24 : vector<8x1xf32> to vector<8x16xf32>
    %26 = arith.addf %23, %25 : vector<8x16xf32>
    %27 = arith.negf %26 : vector<8x16xf32>
    %28 = math.exp %27 : vector<8x16xf32>
    %cst_19 = arith.constant 1.000000e+00 : f32
    %29 = vector.broadcast %cst_19 : f32 to vector<8x16xf32>
    %30 = arith.addf %29, %28 : vector<8x16xf32>
    %31 = arith.divf %29, %30 : vector<8x16xf32>
    %c0_20 = arith.constant 0 : index
    %c0_21 = arith.constant 0 : index
    %32 = vector.load %arg10[%c0_20, %c0_21] : memref<8x16xf32, #tpu.memory_space<vmem>>, vector<8x16xf32>
    %cst_22 = arith.constant dense<0.000000e+00> : vector<8x16xf32>
    %33 = tpu.matmul %32, %21, %cst_22 {dimension_numbers = #tpu.dot_dimension_numbers<[1], [0], [0], [1], [0, 0, 1, 1], [], []>} : vector<8x16xf32>, vector<16x16xf32>, vector<8x16xf32> -> vector<8x16xf32>
    %c0_23 = arith.constant 0 : index
    %c0_24 = arith.constant 0 : index
    %34 = vector.load %arg11[%c0_23, %c0_24] : memref<8x1xf32, #tpu.memory_space<vmem>>, vector<8x1xf32>
    %35 = vector.broadcast %34 : vector<8x1xf32> to vector<8x16xf32>
    %36 = arith.addf %33, %35 : vector<8x16xf32>
    %37 = arith.negf %36 : vector<8x16xf32>
    %38 = math.exp %37 : vector<8x16xf32>
    %cst_25 = arith.constant 1.000000e+00 : f32
    %39 = vector.broadcast %cst_25 : f32 to vector<8x16xf32>
    %40 = arith.addf %39, %38 : vector<8x16xf32>
    %41 = arith.divf %39, %40 : vector<8x16xf32>
    %c0_26 = arith.constant 0 : index
    %c0_27 = arith.constant 0 : index
    %42 = vector.load %arg4[%c0_26, %c0_27] : memref<16x256xf32, #tpu.memory_space<vmem>>, vector<16x256xf32>
    %cst_28 = arith.constant dense<0.000000e+00> : vector<8x256xf32>
    %43 = tpu.matmul %31, %42, %cst_28 {dimension_numbers = #tpu.dot_dimension_numbers<[1], [0], [0], [1], [0, 0, 1, 1], [], []>} : vector<8x16xf32>, vector<16x256xf32>, vector<8x256xf32> -> vector<8x256xf32>
    %c0_29 = arith.constant 0 : index
    %c0_30 = arith.constant 0 : index
    %44 = vector.load %arg5[%c0_29, %c0_30] : memref<16x256xf32, #tpu.memory_space<vmem>>, vector<16x256xf32>
    %cst_31 = arith.constant dense<0.000000e+00> : vector<8x256xf32>
    %45 = tpu.matmul %41, %44, %cst_31 {dimension_numbers = #tpu.dot_dimension_numbers<[1], [0], [0], [1], [0, 0, 1, 1], [], []>} : vector<8x16xf32>, vector<16x256xf32>, vector<8x256xf32> -> vector<8x256xf32>
    %46 = arith.mulf %43, %45 : vector<8x256xf32>
    %47 = arith.mulf %0, %46 : vector<8x256xf32>
    %c0_32 = arith.constant 0 : index
    %c0_33 = arith.constant 0 : index
    %48 = vector.load %arg12[%c0_32, %c0_33] : memref<8x256xf32, #tpu.memory_space<vmem>>, vector<8x256xf32>
    tpu.vector_store %arg12[%c0_32, %c0_33], %47 {strides = array<i32>} : memref<8x256xf32, #tpu.memory_space<vmem>>, vector<8x256xf32>,
    return
  }
  func.func @transform_0(%arg0: i32) -> (i32, i32) {
    %c0_i32 = arith.constant 0 : i32
    %c0_i32_0 = arith.constant 0 : i32
    return %arg0, %c0_i32 : i32, i32
  }
  func.func @transform_1(%arg0: i32) -> (i32, i32) {
    %c0_i32 = arith.constant 0 : i32
    %c0_i32_0 = arith.constant 0 : i32
    %c0_i32_1 = arith.constant 0 : i32
    return %c0_i32, %c0_i32_0 : i32, i32
  }
  func.func @transform_2(%arg0: i32) -> (i32, i32) {
    %c0_i32 = arith.constant 0 : i32
    %c0_i32_0 = arith.constant 0 : i32
    %c0_i32_1 = arith.constant 0 : i32
    return %c0_i32, %c0_i32_0 : i32, i32
  }
  func.func @transform_3(%arg0: i32) -> (i32, i32) {
    %c0_i32 = arith.constant 0 : i32
    %c0_i32_0 = arith.constant 0 : i32
    %c0_i32_1 = arith.constant 0 : i32
    return %c0_i32, %c0_i32_0 : i32, i32
  }
  func.func @transform_4(%arg0: i32) -> (i32, i32) {
    %c0_i32 = arith.constant 0 : i32
    %c0_i32_0 = arith.constant 0 : i32
    %c0_i32_1 = arith.constant 0 : i32
    return %c0_i32, %c0_i32_0 : i32, i32
  }
  func.func @transform_5(%arg0: i32) -> (i32, i32) {
    %c0_i32 = arith.constant 0 : i32
    %c0_i32_0 = arith.constant 0 : i32
    %c0_i32_1 = arith.constant 0 : i32
    return %c0_i32, %c0_i32_0 : i32, i32
  }
  func.func @transform_6(%arg0: i32) -> (i32, i32) {
    %c0_i32 = arith.constant 0 : i32
    %c0_i32_0 = arith.constant 0 : i32
    %c0_i32_1 = arith.constant 0 : i32
    return %c0_i32, %c0_i32_0 : i32, i32
  }
  func.func @transform_7(%arg0: i32) -> (i32, i32) {
    %c0_i32 = arith.constant 0 : i32
    %c0_i32_0 = arith.constant 0 : i32
    %c0_i32_1 = arith.constant 0 : i32
    return %c0_i32, %c0_i32_0 : i32, i32
  }
  func.func @transform_8(%arg0: i32) -> (i32, i32) {
    %c0_i32 = arith.constant 0 : i32
    %c0_i32_0 = arith.constant 0 : i32
    %c0_i32_1 = arith.constant 0 : i32
    return %c0_i32, %c0_i32_0 : i32, i32
  }
  func.func @transform_9(%arg0: i32) -> (i32, i32) {
    %c0_i32 = arith.constant 0 : i32
    %c0_i32_0 = arith.constant 0 : i32
    %c0_i32_1 = arith.constant 0 : i32
    return %c0_i32, %c0_i32_0 : i32, i32
  }
  func.func @transform_10(%arg0: i32) -> (i32, i32) {
    %c0_i32 = arith.constant 0 : i32
    %c0_i32_0 = arith.constant 0 : i32
    %c0_i32_1 = arith.constant 0 : i32
    return %c0_i32, %c0_i32_0 : i32, i32
  }
  func.func @transform_11(%arg0: i32) -> (i32, i32) {
    %c0_i32 = arith.constant 0 : i32
    %c0_i32_0 = arith.constant 0 : i32
    return %arg0, %c0_i32 : i32, i32
  }
}

</mosaic_0001>

<llo_original>
// kernel: tpu_custom_call.1
$region0: #{tpu_custom_call.1}
  #allocation0 [shape = 'u32[]', space=smem, size = 0x4, offset = 0x4, fixed_abs, tag = 'smem constant byte address 0x4 - core index']
  #allocation1 [shape = 'u32[144,128]{1,0:T(1,128)}', space=vmem, size = 0x12000, scoped, tag = 'internal scratch']
  %s0 = inlined_call_operand.vmem [shape: f32[8,256], index: 0, kind: input, shape index: {}]
  %s1 = inlined_call_operand.vmem [shape: f32[256,32], index: 1, kind: input, shape index: {}]
  %s2 = inlined_call_operand.vmem [shape: f32[1,32], index: 2, kind: input, shape index: {}]
  %s3 = inlined_call_operand.vmem [shape: f32[16,256], index: 3, kind: input, shape index: {}]
  %s4 = inlined_call_operand.vmem [shape: f32[16,256], index: 4, kind: input, shape index: {}]
  %s5 = inlined_call_operand.vmem [shape: f32[16,8], index: 5, kind: input, shape index: {}]
  %s6 = inlined_call_operand.vmem [shape: f32[16,1], index: 6, kind: input, shape index: {}]
  %s7 = inlined_call_operand.vmem [shape: f32[8,16], index: 7, kind: input, shape index: {}]
  %s8 = inlined_call_operand.vmem [shape: f32[8,1], index: 8, kind: input, shape index: {}]
  %s9 = inlined_call_operand.vmem [shape: f32[8,16], index: 9, kind: input, shape index: {}]
  %s10 = inlined_call_operand.vmem [shape: f32[8,1], index: 10, kind: input, shape index: {}]
  %s11 = inlined_call_operand.hbm [shape: f32[8,256], index: 11, kind: output, shape index: {}]
  %s12 = sld [smem:[#allocation0]]
  $region54: #{tpu_custom_call.1} parent=0
    _
  %s14 = ssub.s32 1, %s12
  %s15 = scalar_select 0, %s14, %s12
  $region1: #{tpu_custom_call.1} parent=0
    #allocation2 [shape = 'u8[8192]{0}', space=vmem, size = 0x2000, scoped, tag = 'output window, operand 0, single buffered']
    #allocation3 [shape = 's32[1]{0}', space=sflag, size = 0x4, scoped, tag = 'scoped memory for tpu_custom_call.1']
    %16 = vsyncpa [#allocation3], 0
    // Predicated region
    $region2: #{tpu_custom_call.1} parent=1 // pred_check
      _
    $region3: #{tpu_custom_call.1} parent=1 // pred_check_branch
      %18 = sbr.rel (0) target = $region5
    $region4: #{tpu_custom_call.1} parent=1 // pred_region
      _
    $region5: #{tpu_custom_call.1} parent=1 // pred_fallthru
      _
    // Predicated region
    $region6: #{tpu_custom_call.1} parent=1 // pred_check
      _
    $region7: #{tpu_custom_call.1} parent=1 // pred_check_branch
      %20 = sbr.rel (0) target = $region9
    $region8: #{tpu_custom_call.1} parent=1 // pred_region
      _
    $region9: #{tpu_custom_call.1} parent=1 // pred_fallthru
      _
    // Predicated region
    $region10: #{tpu_custom_call.1} parent=1 // pred_check
      _
    $region11: #{tpu_custom_call.1} parent=1 // pred_check_branch
      %22 = sbr.rel (0) target = $region13
    $region12: #{tpu_custom_call.1} parent=1 // pred_region
      _
    $region13: #{tpu_custom_call.1} parent=1 // pred_fallthru
      _
    // Predicated region
    $region14: #{tpu_custom_call.1} parent=1 // pred_check
      _
    $region15: #{tpu_custom_call.1} parent=1 // pred_check_branch
      %24 = sbr.rel (0) target = $region17
    $region16: #{tpu_custom_call.1} parent=1 // pred_region
      _
    $region17: #{tpu_custom_call.1} parent=1 // pred_fallthru
      _
    // Predicated region
    $region18: #{tpu_custom_call.1} parent=1 // pred_check
      _
    $region19: #{tpu_custom_call.1} parent=1 // pred_check_branch
      %26 = sbr.rel (0) target = $region21
    $region20: #{tpu_custom_call.1} parent=1 // pred_region
      _
    $region21: #{tpu_custom_call.1} parent=1 // pred_fallthru
      _
    // Predicated region
    $region22: #{tpu_custom_call.1} parent=1 // pred_check
      _
    $region23: #{tpu_custom_call.1} parent=1 // pred_check_branch
      %28 = sbr.rel (0) target = $region25
    $region24: #{tpu_custom_call.1} parent=1 // pred_region
      _
    $region25: #{tpu_custom_call.1} parent=1 // pred_fallthru
      _
    // Predicated region
    $region26: #{tpu_custom_call.1} parent=1 // pred_check
      _
    $region27: #{tpu_custom_call.1} parent=1 // pred_check_branch
      %30 = sbr.rel (0) target = $region29
    $region28: #{tpu_custom_call.1} parent=1 // pred_region
      _
    $region29: #{tpu_custom_call.1} parent=1 // pred_fallthru
      _
    // Predicated region
    $region30: #{tpu_custom_call.1} parent=1 // pred_check
      _
    $region31: #{tpu_custom_call.1} parent=1 // pred_check_branch
      %32 = sbr.rel (0) target = $region33
    $region32: #{tpu_custom_call.1} parent=1 // pred_region
      _
    $region33: #{tpu_custom_call.1} parent=1 // pred_fallthru
      _
    // Predicated region
    $region34: #{tpu_custom_call.1} parent=1 // pred_check
      _
    $region35: #{tpu_custom_call.1} parent=1 // pred_check_branch
      %34 = sbr.rel (0) target = $region37
    $region36: #{tpu_custom_call.1} parent=1 // pred_region
      _
    $region37: #{tpu_custom_call.1} parent=1 // pred_fallthru
      _
    // Predicated region
    $region38: #{tpu_custom_call.1} parent=1 // pred_check
      _
    $region39: #{tpu_custom_call.1} parent=1 // pred_check_branch
      %36 = sbr.rel (0) target = $region41
    $region40: #{tpu_custom_call.1} parent=1 // pred_region
      _
    $region41: #{tpu_custom_call.1} parent=1 // pred_fallthru
      _
    // Predicated region
    $region42: #{tpu_custom_call.1} parent=1 // pred_check
      _
    $region43: #{tpu_custom_call.1} parent=1 // pred_check_branch
      %38 = sbr.rel (0) target = $region45
    $region44: #{tpu_custom_call.1} parent=1 // pred_region
      _
    $region45: #{tpu_custom_call.1} parent=1 // pred_fallthru
      _
    %v39 = vld [vmem:[%s0] sm:$0xff]
    %v40 = vld [vmem:[%s0 + $0x8] sm:$0xff]
    %v41 = vld [vmem:[%s1] sm:$0xff]
    %v42 = vld [vmem:[%s1 + $0x8] sm:$0xff]
    %v43 = vld [vmem:[%s1 + $0x10] sm:$0xff]
    %v44 = vld [vmem:[%s1 + $0x18] sm:$0xff]
    %v45 = vld [vmem:[%s1 + $0x20] sm:$0xff]
    %v46 = vld [vmem:[%s1 + $0x28] sm:$0xff]
    %v47 = vld [vmem:[%s1 + $0x30] sm:$0xff]
    %v48 = vld [vmem:[%s1 + $0x38] sm:$0xff]
    %v49 = vld [vmem:[%s1 + $0x40] sm:$0xff]
    %v50 = vld [vmem:[%s1 + $0x48] sm:$0xff]
    %v51 = vld [vmem:[%s1 + $0x50] sm:$0xff]
    %v52 = vld [vmem:[%s1 + $0x58] sm:$0xff]
    %v53 = vld [vmem:[%s1 + $0x60] sm:$0xff]
    %v54 = vld [vmem:[%s1 + $0x68] sm:$0xff]
    %v55 = vld [vmem:[%s1 + $0x70] sm:$0xff]
    %v56 = vld [vmem:[%s1 + $0x78] sm:$0xff]
    %v57 = vld [vmem:[%s1 + $0x80] sm:$0xff]
    %v58 = vld [vmem:[%s1 + $0x88] sm:$0xff]
    %v59 = vld [vmem:[%s1 + $0x90] sm:$0xff]
    %v60 = vld [vmem:[%s1 + $0x98] sm:$0xff]
    %v61 = vld [vmem:[%s1 + $0xa0] sm:$0xff]
    %v62 = vld [vmem:[%s1 + $0xa8] sm:$0xff]
    %v63 = vld [vmem:[%s1 + $0xb0] sm:$0xff]
    %v64 = vld [vmem:[%s1 + $0xb8] sm:$0xff]
    %v65 = vld [vmem:[%s1 + $0xc0] sm:$0xff]
    %v66 = vld [vmem:[%s1 + $0xc8] sm:$0xff]
    %v67 = vld [vmem:[%s1 + $0xd0] sm:$0xff]
    %v68 = vld [vmem:[%s1 + $0xd8] sm:$0xff]
    %v69 = vld [vmem:[%s1 + $0xe0] sm:$0xff]
    %v70 = vld [vmem:[%s1 + $0xe8] sm:$0xff]
    %v71 = vld [vmem:[%s1 + $0xf0] sm:$0xff]
    %v72 = vld [vmem:[%s1 + $0xf8] sm:$0xff]
    %73 = vmatprep.subr.mxu0 0.0
    %74 = vmatpush1.msra.mxu0 %v41
    %75 = vmatprep.subr.mxu0 0.0
    %76 = vmatpush1.msra.mxu0 %v42
    %77 = vmatprep.subr.mxu0 0.0
    %78 = vmatpush1.msra.mxu0 %v43
    %79 = vmatprep.subr.mxu0 0.0
    %80 = vmatpush1.msra.mxu0 %v44
    %81 = vmatprep.subr.mxu0 0.0
    %82 = vmatpush1.msra.mxu0 %v45
    %83 = vmatprep.subr.mxu0 0.0
    %84 = vmatpush1.msra.mxu0 %v46
    %85 = vmatprep.subr.mxu0 0.0
    %86 = vmatpush1.msra.mxu0 %v47
    %87 = vmatprep.subr.mxu0 0.0
    %88 = vmatpush1.msra.mxu0 %v48
    %89 = vmatprep.subr.mxu0 0.0
    %90 = vmatpush1.msra.mxu0 %v49
    %91 = vmatprep.subr.mxu0 0.0
    %92 = vmatpush1.msra.mxu0 %v50
    %93 = vmatprep.subr.mxu0 0.0
    %94 = vmatpush1.msra.mxu0 %v51
    %95 = vmatprep.subr.mxu0 0.0
    %96 = vmatpush1.msra.mxu0 %v52
    %97 = vmatprep.subr.mxu0 0.0
    %98 = vmatpush1.msra.mxu0 %v53
    %99 = vmatprep.subr.mxu0 0.0
    %100 = vmatpush1.msra.mxu0 %v54
    %101 = vmatprep.subr.mxu0 0.0
    %102 = vmatpush1.msra.mxu0 %v55
    %103 = vmatprep.subr.mxu0 0.0
    %104 = vmatpush1.msra.mxu0 %v56
    %105 = vmatprep.subr.mxu0 0.0
    %106 = vmatpush1.msra.mxu0 %v57
    %107 = vmatprep.subr.mxu0 0.0
    %108 = vmatpush1.msra.mxu0 %v58
    %109 = vmatprep.subr.mxu0 0.0
    %110 = vmatpush1.msra.mxu0 %v59
    %111 = vmatprep.subr.mxu0 0.0
    %112 = vmatpush1.msra.mxu0 %v60
    %113 = vmatprep.subr.mxu0 0.0
    %114 = vmatpush1.msra.mxu0 %v61
    %115 = vmatprep.subr.mxu0 0.0
    %116 = vmatpush1.msra.mxu0 %v62
    %117 = vmatprep.subr.mxu0 0.0
    %118 = vmatpush1.msra.mxu0 %v63
    %119 = vmatprep.subr.mxu0 0.0
    %120 = vmatpush1.msra.mxu0 %v64
    %121 = vmatprep.subr.mxu0 0.0
    %122 = vmatpush1.msra.mxu0 %v65
    %123 = vmatprep.subr.mxu0 0.0
    %124 = vmatpush1.msra.mxu0 %v66
    %125 = vmatprep.subr.mxu0 0.0
    %126 = vmatpush1.msra.mxu0 %v67
    %127 = vmatprep.subr.mxu0 0.0
    %128 = vmatpush1.msra.mxu0 %v68
    %129 = vmatprep.subr.mxu0 0.0
    %130 = vmatpush1.msra.mxu0 %v69
    %131 = vmatprep.subr.mxu0 0.0
    %132 = vmatpush1.msra.mxu0 %v70
    %133 = vmatprep.subr.mxu0 0.0
    %134 = vmatpush1.msra.mxu0 %v71
    %135 = vmatprep.subr.mxu0 0.0
    %136 = vmatpush1.msra.mxu0 %v72
    %137 = vmatprep.mubr.f32.mxu0 %v40
    %138 = vmatmul.mubr.f32.gmra.mrb[0].mxu0 %v39
    %v139 = vpop.f32.mrb[0].mxu0
    %v140 = vadd.f32 0.0, %v139
    %v141 = vpop.f32.mrb[0].mxu0
    %142 = vdwg.mxu0
    %v143 = vld [vmem:[%s2] sm:$0x1]
    %v145 = vlaneseq
    %v146 = vshrl.u32 %v145, 7
    %v147 = vsub.s32 0, %v146
    %v148 = vrot.slane %v143, %v147
    %v150 = vmul.f32 %v140, %v148
    %v151 = vld [vmem:[%s5] sm:$0xff]
    %v152 = vld [vmem:[%s5 + $0x8] sm:$0xff]
    %v153 = vld [vmem:[%s6] sm:$0xff]
    %v154 = vld [vmem:[%s6 + $0x8] sm:$0xff]
    %156 = vset.pattern.permute.xlu0 0
    %157 = vperm.xlu0 %156, %v153
    %v158 = vpop.permute.xlu0 %157
    %161 = vset.pattern.permute.xlu0 0
    %162 = vperm.xlu0 %161, %v154
    %v163 = vpop.permute.xlu0 %162
    %vm165 = vcmask 64512
    %v167 = vsel %vm165, %v151, 0
    %v170 = vsel %vm165, %v152, 0
    %172 = vmatprep.subr.mxu0 0.0
    %173 = vmatpush1.msra.mxu0 %v150
    %174 = vmatprep.subr.mxu0 0.0
    %175 = vmatpush1.msra.mxu0 0.0
    %176 = vmatprep.subr.mxu0 0.0
    %177 = vmatpush1.msra.mxu0 0.0
    %178 = vmatprep.subr.mxu0 0.0
    %179 = vmatpush1.msra.mxu0 0.0
    %180 = vmatprep.subr.mxu0 0.0
    %181 = vmatpush1.msra.mxu0 0.0
    %182 = vmatprep.subr.mxu0 0.0
    %183 = vmatpush1.msra.mxu0 0.0
    %184 = vmatprep.subr.mxu0 0.0
    %185 = vmatpush1.msra.mxu0 0.0
    %186 = vmatprep.subr.mxu0 0.0
    %187 = vmatpush1.msra.mxu0 0.0
    %188 = vmatprep.subr.mxu0 0.0
    %189 = vmatpush1.msra.mxu0 0.0
    %190 = vmatprep.subr.mxu0 0.0
    %191 = vmatpush1.msra.mxu0 0.0
    %192 = vmatprep.subr.mxu0 0.0
    %193 = vmatpush1.msra.mxu0 0.0
    %194 = vmatprep.subr.mxu0 0.0
    %195 = vmatpush1.msra.mxu0 0.0
    %196 = vmatprep.subr.mxu0 0.0
    %197 = vmatpush1.msra.mxu0 0.0
    %198 = vmatprep.subr.mxu0 0.0
    %199 = vmatpush1.msra.mxu0 0.0
    %200 = vmatprep.subr.mxu0 0.0
    %201 = vmatpush1.msra.mxu0 0.0
    %202 = vmatprep.subr.mxu0 0.0
    %203 = vmatpush1.msra.mxu0 0.0
    %204 = vmatprep.subr.mxu0 0.0
    %205 = vmatpush1.msra.mxu0 0.0
    %206 = vmatprep.subr.mxu0 0.0
    %207 = vmatpush1.msra.mxu0 0.0
    %208 = vmatprep.subr.mxu0 0.0
    %209 = vmatpush1.msra.mxu0 0.0
    %210 = vmatprep.subr.mxu0 0.0
    %211 = vmatpush1.msra.mxu0 0.0
    %212 = vmatprep.subr.mxu0 0.0
    %213 = vmatpush1.msra.mxu0 0.0
    %214 = vmatprep.subr.mxu0 0.0
    %215 = vmatpush1.msra.mxu0 0.0
    %216 = vmatprep.subr.mxu0 0.0
    %217 = vmatpush1.msra.mxu0 0.0
    %218 = vmatprep.subr.mxu0 0.0
    %219 = vmatpush1.msra.mxu0 0.0
    %220 = vmatprep.subr.mxu0 0.0
    %221 = vmatpush1.msra.mxu0 0.0
    %222 = vmatprep.subr.mxu0 0.0
    %223 = vmatpush1.msra.mxu0 0.0
    %224 = vmatprep.subr.mxu0 0.0
    %225 = vmatpush1.msra.mxu0 0.0
    %226 = vmatprep.subr.mxu0 0.0
    %227 = vmatpush1.msra.mxu0 0.0
    %228 = vmatprep.subr.mxu0 0.0
    %229 = vmatpush1.msra.mxu0 0.0
    %230 = vmatprep.subr.mxu0 0.0
    %231 = vmatpush1.msra.mxu0 0.0
    %232 = vmatprep.subr.mxu0 0.0
    %233 = vmatpush1.msra.mxu0 0.0
    %234 = vmatprep.subr.mxu0 0.0
    %235 = vmatpush1.msra.mxu0 0.0
    %236 = vmatprep.mubr.f32.mxu0 0.0
    %237 = vmatmul.mubr.f32.gmra.mrb[0].mxu0 %v167
    %v238 = vpop.f32.mrb[0].mxu0
    %v239 = vadd.f32 %v158, %v238
    %v240 = vpop.f32.mrb[0].mxu0
    %241 = vmatprep.mubr.f32.mxu0 0.0
    %242 = vmatmul.mubr.f32.gmra.mrb[0].mxu0 %v170
    %v243 = vpop.f32.mrb[0].mxu0
    %v244 = vadd.f32 %v163, %v243
    %v245 = vpop.f32.mrb[0].mxu0
    %246 = vdwg.mxu0
    %v247 = vadd.f32 %v239, 3.0
    %v248 = vadd.f32 %v244, 3.0
    %v249 = vmax.f32 %v247, 0.0
    %v250 = vmax.f32 %v248, 0.0
    %v251 = vmin.f32 %v249, 6.0
    %v252 = vmin.f32 %v250, 6.0
    %v253 = vmul.f32 %v251, 0.16666667
    %v254 = vmul.f32 %v252, 0.16666667
    %v255 = vmul.f32 %v239, %v253
    %v256 = vmul.f32 %v244, %v254
    %v257 = vld [vmem:[%s7] sm:$0xff]
    %v258 = vld [vmem:[%s8] sm:$0xff]
    %260 = vset.pattern.permute.xlu0 0
    %261 = vperm.xlu0 %260, %v258
    %v262 = vpop.permute.xlu0 %261
    %vm264 = vcmask 130048
    %v266 = vsel %vm264, %v257, 0
    %268 = vmatprep.subr.mxu0 0.0
    %269 = vmatpush1.msra.mxu0 %v255
    %270 = vmatprep.subr.mxu0 0.0
    %271 = vmatpush1.msra.mxu0 %v256
    %272 = vmatprep.subr.mxu0 0.0
    %273 = vmatpush1.msra.mxu0 0.0
    %274 = vmatprep.subr.mxu0 0.0
    %275 = vmatpush1.msra.mxu0 0.0
    %276 = vmatprep.subr.mxu0 0.0
    %277 = vmatpush1.msra.mxu0 0.0
    %278 = vmatprep.subr.mxu0 0.0
    %279 = vmatpush1.msra.mxu0 0.0
    %280 = vmatprep.subr.mxu0 0.0
    %281 = vmatpush1.msra.mxu0 0.0
    %282 = vmatprep.subr.mxu0 0.0
    %283 = vmatpush1.msra.mxu0 0.0
    %284 = vmatprep.subr.mxu0 0.0
    %285 = vmatpush1.msra.mxu0 0.0
    %286 = vmatprep.subr.mxu0 0.0
    %287 = vmatpush1.msra.mxu0 0.0
    %288 = vmatprep.subr.mxu0 0.0
    %289 = vmatpush1.msra.mxu0 0.0
    %290 = vmatprep.subr.mxu0 0.0
    %291 = vmatpush1.msra.mxu0 0.0
    %292 = vmatprep.subr.mxu0 0.0
    %293 = vmatpush1.msra.mxu0 0.0
    %294 = vmatprep.subr.mxu0 0.0
    %295 = vmatpush1.msra.mxu0 0.0
    %296 = vmatprep.subr.mxu0 0.0
    %297 = vmatpush1.msra.mxu0 0.0
    %298 = vmatprep.subr.mxu0 0.0
    %299 = vmatpush1.msra.mxu0 0.0
    %300 = vmatprep.subr.mxu0 0.0
    %301 = vmatpush1.msra.mxu0 0.0
    %302 = vmatprep.subr.mxu0 0.0
    %303 = vmatpush1.msra.mxu0 0.0
    %304 = vmatprep.subr.mxu0 0.0
    %305 = vmatpush1.msra.mxu0 0.0
    %306 = vmatprep.subr.mxu0 0.0
    %307 = vmatpush1.msra.mxu0 0.0
    %308 = vmatprep.subr.mxu0 0.0
    %309 = vmatpush1.msra.mxu0 0.0
    %310 = vmatprep.subr.mxu0 0.0
    %311 = vmatpush1.msra.mxu0 0.0
    %312 = vmatprep.subr.mxu0 0.0
    %313 = vmatpush1.msra.mxu0 0.0
    %314 = vmatprep.subr.mxu0 0.0
    %315 = vmatpush1.msra.mxu0 0.0
    %316 = vmatprep.subr.mxu0 0.0
    %317 = vmatpush1.msra.mxu0 0.0
    %318 = vmatprep.subr.mxu0 0.0
    %319 = vmatpush1.msra.mxu0 0.0
    %320 = vmatprep.subr.mxu0 0.0
    %321 = vmatpush1.msra.mxu0 0.0
    %322 = vmatprep.subr.mxu0 0.0
    %323 = vmatpush1.msra.mxu0 0.0
    %324 = vmatprep.subr.mxu0 0.0
    %325 = vmatpush1.msra.mxu0 0.0
    %326 = vmatprep.subr.mxu0 0.0
    %327 = vmatpush1.msra.mxu0 0.0
    %328 = vmatprep.subr.mxu0 0.0
    %329 = vmatpush1.msra.mxu0 0.0
    %330 = vmatprep.subr.mxu0 0.0
    %331 = vmatpush1.msra.mxu0 0.0
    %332 = vmatprep.mubr.f32.mxu0 0.0
    %333 = vmatmul.mubr.f32.gmra.mrb[0].mxu0 %v266
    %v334 = vpop.f32.mrb[0].mxu0
    %v335 = vadd.f32 %v262, %v334
    %v336 = vpop.f32.mrb[0].mxu0
    %337 = vdwg.mxu0
    %v338 = vxor.u32 %v335, 2147483648
    %v339 = vmul.f32 %v338, 1.442695
    %v340 = vpow.pop %v339
    %v341 = vadd.f32 %v340, 1.0
    %v342 = vrcp.pop %v341
    %v343 = vmul.f32 1.0, %v342
    %v344 = vld [vmem:[%s9] sm:$0xff]
    %v345 = vld [vmem:[%s10] sm:$0xff]
    %347 = vset.pattern.permute.xlu0 0
    %348 = vperm.xlu0 %347, %v345
    %v349 = vpop.permute.xlu0 %348
    %353 = vrot.lane.b32.xlu0 %v255, 112
    %v354 = vpop.permute.xlu0 %353
    %355 = vrot.lane.b32.xlu0 %v256, 112
    %v356 = vpop.permute.xlu0 %355
    %v360 = vsel %vm264, %v344, 0
    %362 = vmatprep.subr.mxu0 0.0
    %363 = vmatpush1.msra.mxu0 %v354
    %364 = vmatprep.subr.mxu0 0.0
    %365 = vmatpush1.msra.mxu0 %v356
    %366 = vmatprep.subr.mxu0 0.0
    %367 = vmatpush1.msra.mxu0 0.0
    %368 = vmatprep.subr.mxu0 0.0
    %369 = vmatpush1.msra.mxu0 0.0
    %370 = vmatprep.subr.mxu0 0.0
    %371 = vmatpush1.msra.mxu0 0.0
    %372 = vmatprep.subr.mxu0 0.0
    %373 = vmatpush1.msra.mxu0 0.0
    %374 = vmatprep.subr.mxu0 0.0
    %375 = vmatpush1.msra.mxu0 0.0
    %376 = vmatprep.subr.mxu0 0.0
    %377 = vmatpush1.msra.mxu0 0.0
    %378 = vmatprep.subr.mxu0 0.0
    %379 = vmatpush1.msra.mxu0 0.0
    %380 = vmatprep.subr.mxu0 0.0
    %381 = vmatpush1.msra.mxu0 0.0
    %382 = vmatprep.subr.mxu0 0.0
    %383 = vmatpush1.msra.mxu0 0.0
    %384 = vmatprep.subr.mxu0 0.0
    %385 = vmatpush1.msra.mxu0 0.0
    %386 = vmatprep.subr.mxu0 0.0
    %387 = vmatpush1.msra.mxu0 0.0
    %388 = vmatprep.subr.mxu0 0.0
    %389 = vmatpush1.msra.mxu0 0.0
    %390 = vmatprep.subr.mxu0 0.0
    %391 = vmatpush1.msra.mxu0 0.0
    %392 = vmatprep.subr.mxu0 0.0
    %393 = vmatpush1.msra.mxu0 0.0
    %394 = vmatprep.subr.mxu0 0.0
    %395 = vmatpush1.msra.mxu0 0.0
    %396 = vmatprep.subr.mxu0 0.0
    %397 = vmatpush1.msra.mxu0 0.0
    %398 = vmatprep.subr.mxu0 0.0
    %399 = vmatpush1.msra.mxu0 0.0
    %400 = vmatprep.subr.mxu0 0.0
    %401 = vmatpush1.msra.mxu0 0.0
    %402 = vmatprep.subr.mxu0 0.0
    %403 = vmatpush1.msra.mxu0 0.0
    %404 = vmatprep.subr.mxu0 0.0
    %405 = vmatpush1.msra.mxu0 0.0
    %406 = vmatprep.subr.mxu0 0.0
    %407 = vmatpush1.msra.mxu0 0.0
    %408 = vmatprep.subr.mxu0 0.0
    %409 = vmatpush1.msra.mxu0 0.0
    %410 = vmatprep.subr.mxu0 0.0
    %411 = vmatpush1.msra.mxu0 0.0
    %412 = vmatprep.subr.mxu0 0.0
    %413 = vmatpush1.msra.mxu0 0.0
    %414 = vmatprep.subr.mxu0 0.0
    %415 = vmatpush1.msra.mxu0 0.0
    %416 = vmatprep.subr.mxu0 0.0
    %417 = vmatpush1.msra.mxu0 0.0
    %418 = vmatprep.subr.mxu0 0.0
    %419 = vmatpush1.msra.mxu0 0.0
    %420 = vmatprep.subr.mxu0 0.0
    %421 = vmatpush1.msra.mxu0 0.0
    %422 = vmatprep.subr.mxu0 0.0
    %423 = vmatpush1.msra.mxu0 0.0
    %424 = vmatprep.subr.mxu0 0.0
    %425 = vmatpush1.msra.mxu0 0.0
    %426 = vmatprep.mubr.f32.mxu0 0.0
    %427 = vmatmul.mubr.f32.gmra.mrb[0].mxu0 %v360
    %v428 = vpop.f32.mrb[0].mxu0
    %v429 = vadd.f32 %v349, %v428
    %v430 = vpop.f32.mrb[0].mxu0
    %431 = vdwg.mxu0
    %v432 = vxor.u32 %v429, 2147483648
    %v433 = vmul.f32 %v432, 1.442695
    %v434 = vpow.pop %v433
    %v435 = vadd.f32 %v434, 1.0
    %v436 = vrcp.pop %v435
    %v437 = vmul.f32 1.0, %v436
    %v438 = vld [vmem:[%s3] sm:$0xff]
    %v439 = vld [vmem:[%s3 + $0x8] sm:$0xff]
    %v440 = vld [vmem:[%s3 + $0x10] sm:$0xff]
    %v441 = vld [vmem:[%s3 + $0x18] sm:$0xff]
    %v443 = vsel %vm264, %v343, 0
    %445 = vmatprep.subr.mxu0 %v439
    %446 = vmatpush1.msra.mxu0 %v438
    %447 = vmatprep.subr.mxu0 %v441
    %448 = vmatpush1.msra.mxu0 %v440
    %449 = vmatprep.subr.mxu0 0.0
    %450 = vmatpush1.msra.mxu0 0.0
    %451 = vmatprep.subr.mxu0 0.0
    %452 = vmatpush1.msra.mxu0 0.0
    %453 = vmatprep.subr.mxu0 0.0
    %454 = vmatpush1.msra.mxu0 0.0
    %455 = vmatprep.subr.mxu0 0.0
    %456 = vmatpush1.msra.mxu0 0.0
    %457 = vmatprep.subr.mxu0 0.0
    %458 = vmatpush1.msra.mxu0 0.0
    %459 = vmatprep.subr.mxu0 0.0
    %460 = vmatpush1.msra.mxu0 0.0
    %461 = vmatprep.subr.mxu0 0.0
    %462 = vmatpush1.msra.mxu0 0.0
    %463 = vmatprep.subr.mxu0 0.0
    %464 = vmatpush1.msra.mxu0 0.0
    %465 = vmatprep.subr.mxu0 0.0
    %466 = vmatpush1.msra.mxu0 0.0
    %467 = vmatprep.subr.mxu0 0.0
    %468 = vmatpush1.msra.mxu0 0.0
    %469 = vmatprep.subr.mxu0 0.0
    %470 = vmatpush1.msra.mxu0 0.0
    %471 = vmatprep.subr.mxu0 0.0
    %472 = vmatpush1.msra.mxu0 0.0
    %473 = vmatprep.subr.mxu0 0.0
    %474 = vmatpush1.msra.mxu0 0.0
    %475 = vmatprep.subr.mxu0 0.0
    %476 = vmatpush1.msra.mxu0 0.0
    %477 = vmatprep.subr.mxu0 0.0
    %478 = vmatpush1.msra.mxu0 0.0
    %479 = vmatprep.subr.mxu0 0.0
    %480 = vmatpush1.msra.mxu0 0.0
    %481 = vmatprep.subr.mxu0 0.0
    %482 = vmatpush1.msra.mxu0 0.0
    %483 = vmatprep.subr.mxu0 0.0
    %484 = vmatpush1.msra.mxu0 0.0
    %485 = vmatprep.subr.mxu0 0.0
    %486 = vmatpush1.msra.mxu0 0.0
    %487 = vmatprep.subr.mxu0 0.0
    %488 = vmatpush1.msra.mxu0 0.0
    %489 = vmatprep.subr.mxu0 0.0
    %490 = vmatpush1.msra.mxu0 0.0
    %491 = vmatprep.subr.mxu0 0.0
    %492 = vmatpush1.msra.mxu0 0.0
    %493 = vmatprep.subr.mxu0 0.0
    %494 = vmatpush1.msra.mxu0 0.0
    %495 = vmatprep.subr.mxu0 0.0
    %496 = vmatpush1.msra.mxu0 0.0
    %497 = vmatprep.subr.mxu0 0.0
    %498 = vmatpush1.msra.mxu0 0.0
    %499 = vmatprep.subr.mxu0 0.0
    %500 = vmatpush1.msra.mxu0 0.0
    %501 = vmatprep.subr.mxu0 0.0
    %502 = vmatpush1.msra.mxu0 0.0
    %503 = vmatprep.subr.mxu0 0.0
    %504 = vmatpush1.msra.mxu0 0.0
    %505 = vmatprep.subr.mxu0 0.0
    %506 = vmatpush1.msra.mxu0 0.0
    %507 = vmatprep.subr.mxu0 0.0
    %508 = vmatpush1.msra.mxu0 0.0
    %509 = vmatprep.mubr.f32.mxu0 0.0
    %510 = vmatmul.mubr.f32.gmra.mrb[0].mxu0 %v443
    %v511 = vpop.f32.mrb[0].mxu0
    %v512 = vadd.f32 0.0, %v511
    %v513 = vpop.f32.mrb[0].mxu0
    %v514 = vadd.f32 0.0, %v513
    %515 = vdwg.mxu0
    %v516 = vld [vmem:[%s4] sm:$0xff]
    %v517 = vld [vmem:[%s4 + $0x8] sm:$0xff]
    %v518 = vld [vmem:[%s4 + $0x10] sm:$0xff]
    %v519 = vld [vmem:[%s4 + $0x18] sm:$0xff]
    %v521 = vsel %vm264, %v437, 0
    %523 = vmatprep.subr.mxu0 %v517
    %524 = vmatpush1.msra.mxu0 %v516
    %525 = vmatprep.subr.mxu0 %v519
    %526 = vmatpush1.msra.mxu0 %v518
    %527 = vmatprep.subr.mxu0 0.0
    %528 = vmatpush1.msra.mxu0 0.0
    %529 = vmatprep.subr.mxu0 0.0
    %530 = vmatpush1.msra.mxu0 0.0
    %531 = vmatprep.subr.mxu0 0.0
    %532 = vmatpush1.msra.mxu0 0.0
    %533 = vmatprep.subr.mxu0 0.0
    %534 = vmatpush1.msra.mxu0 0.0
    %535 = vmatprep.subr.mxu0 0.0
    %536 = vmatpush1.msra.mxu0 0.0
    %537 = vmatprep.subr.mxu0 0.0
    %538 = vmatpush1.msra.mxu0 0.0
    %539 = vmatprep.subr.mxu0 0.0
    %540 = vmatpush1.msra.mxu0 0.0
    %541 = vmatprep.subr.mxu0 0.0
    %542 = vmatpush1.msra.mxu0 0.0
    %543 = vmatprep.subr.mxu0 0.0
    %544 = vmatpush1.msra.mxu0 0.0
    %545 = vmatprep.subr.mxu0 0.0
    %546 = vmatpush1.msra.mxu0 0.0
    %547 = vmatprep.subr.mxu0 0.0
    %548 = vmatpush1.msra.mxu0 0.0
    %549 = vmatprep.subr.mxu0 0.0
    %550 = vmatpush1.msra.mxu0 0.0
    %551 = vmatprep.subr.mxu0 0.0
    %552 = vmatpush1.msra.mxu0 0.0
    %553 = vmatprep.subr.mxu0 0.0
    %554 = vmatpush1.msra.mxu0 0.0
    %555 = vmatprep.subr.mxu0 0.0
    %556 = vmatpush1.msra.mxu0 0.0
    %557 = vmatprep.subr.mxu0 0.0
    %558 = vmatpush1.msra.mxu0 0.0
    %559 = vmatprep.subr.mxu0 0.0
    %560 = vmatpush1.msra.mxu0 0.0
    %561 = vmatprep.subr.mxu0 0.0
    %562 = vmatpush1.msra.mxu0 0.0
    %563 = vmatprep.subr.mxu0 0.0
    %564 = vmatpush1.msra.mxu0 0.0
    %565 = vmatprep.subr.mxu0 0.0
    %566 = vmatpush1.msra.mxu0 0.0
    %567 = vmatprep.subr.mxu0 0.0
    %568 = vmatpush1.msra.mxu0 0.0
    %569 = vmatprep.subr.mxu0 0.0
    %570 = vmatpush1.msra.mxu0 0.0
    %571 = vmatprep.subr.mxu0 0.0
    %572 = vmatpush1.msra.mxu0 0.0
    %573 = vmatprep.subr.mxu0 0.0
    %574 = vmatpush1.msra.mxu0 0.0
    %575 = vmatprep.subr.mxu0 0.0
    %576 = vmatpush1.msra.mxu0 0.0
    %577 = vmatprep.subr.mxu0 0.0
    %578 = vmatpush1.msra.mxu0 0.0
    %579 = vmatprep.subr.mxu0 0.0
    %580 = vmatpush1.msra.mxu0 0.0
    %581 = vmatprep.subr.mxu0 0.0
    %582 = vmatpush1.msra.mxu0 0.0
    %583 = vmatprep.subr.mxu0 0.0
    %584 = vmatpush1.msra.mxu0 0.0
    %585 = vmatprep.subr.mxu0 0.0
    %586 = vmatpush1.msra.mxu0 0.0
    %587 = vmatprep.mubr.f32.mxu0 0.0
    %588 = vmatmul.mubr.f32.gmra.mrb[0].mxu0 %v521
    %v589 = vpop.f32.mrb[0].mxu0
    %v590 = vadd.f32 0.0, %v589
    %v591 = vpop.f32.mrb[0].mxu0
    %v592 = vadd.f32 0.0, %v591
    %593 = vdwg.mxu0
    %v594 = vmul.f32 %v512, %v590
    %v595 = vmul.f32 %v514, %v592
    %v596 = vmul.f32 %v39, %v594
    %v597 = vmul.f32 %v40, %v595
    %598 = vst [vmem:[#allocation2] sm:$0xff] %v596
    %599 = vst [vmem:[#allocation2 + $0x8] sm:$0xff] %v597
    // Predicated region
    $region46: #{tpu_custom_call.1} parent=1 // pred_check
      _
    $region47: #{tpu_custom_call.1} parent=1 // pred_check_branch
      %601 = sbr.rel (0) target = $region49
    $region48: #{tpu_custom_call.1} parent=1 // pred_region
      %s603 = ssub.s32 256, 256
      %604 = vsyncadd [#allocation3], %s603
      %s606 = sshll.u32 [#allocation2], 4
      %s607 = int_to_ptr.vmem [resolvable:$true] %s606
      %609 = dma.vmem_to_hbm [thread:$0]  %s607, 256, %s11, [#allocation3]
    $region49: #{tpu_custom_call.1} parent=1 // pred_fallthru
      _
    // Predicated region
    $region50: #{tpu_custom_call.1} parent=1 // pred_check
      _
    $region51: #{tpu_custom_call.1} parent=1 // pred_check_branch
      %611 = sbr.rel (0) target = $region53
    $region52: #{tpu_custom_call.1} parent=1 // pred_region
      %612 = dma.done [#allocation3], 256
    $region53: #{tpu_custom_call.1} parent=1 // pred_fallthru
      _
    %613 = vsyncpa [#allocation3], 1

</llo_original>
